<compile_context>
chip_gen: v7x
topology: tpu7x:2x2x1
jax: 0.10.0
libtpu: 0.0.40
codegen_flags: <defaults>
</compile_context>

<pallas_src>
import functools

import jax
import jax.numpy as jnp
from jax.experimental import pallas as pl
from jax.experimental.pallas import tpu as pltpu


def _pick_tile(dim, target):
    """target if it evenly divides dim, else the full dim (keeps (8,128) rule)."""
    return target if (dim % target == 0) else dim


# ---------------------------------------------------------------------------
# Tiled projection matmul:  H0_p = H0 @ proj_m   ('affine' projection)
# ---------------------------------------------------------------------------
def _matmul_kernel(a_ref, b_ref, o_ref, acc_ref):
    @pl.when(pl.program_id(2) == 0)
    def _():
        acc_ref[...] = jnp.zeros(acc_ref.shape, acc_ref.dtype)

    acc_ref[...] += jnp.dot(a_ref[...], b_ref[...],
                            preferred_element_type=jnp.float32)

    @pl.when(pl.program_id(2) == pl.num_programs(2) - 1)
    def _():
        o_ref[...] = acc_ref[...].astype(o_ref.dtype)


def pallas_matmul(a, b, *, tm=256, tn=128, tk=128):
    M, K = a.shape
    _, N = b.shape
    tm, tn, tk = _pick_tile(M, tm), _pick_tile(N, tn), _pick_tile(K, tk)
    return pl.pallas_call(
        _matmul_kernel,
        out_shape=jax.ShapeDtypeStruct((M, N), jnp.float32),
        grid=(M // tm, N // tn, K // tk),
        in_specs=[pl.BlockSpec((tm, tk), lambda i, j, k: (i, k)),
                  pl.BlockSpec((tk, tn), lambda i, j, k: (k, j))],
        out_specs=pl.BlockSpec((tm, tn), lambda i, j, k: (i, j)),
        scratch_shapes=[pltpu.VMEM((tm, tn), jnp.float32)],
        compiler_params=pltpu.CompilerParams(
            dimension_semantics=("parallel", "parallel", "arbitrary")),
    )(a, b)


# ---------------------------------------------------------------------------
# s2 row:  s2 = (H0_p @ att_w2)^T  -> (1, N), computed ONCE per forward
# (hoisted out of the per-node-type loop).
# ---------------------------------------------------------------------------
def _row_score_kernel(w2_ref, h0p_ref, o_ref):
    o_ref[...] = jax.lax.dot_general(
        w2_ref[...], h0p_ref[...], (((1,), (1,)), ((), ())),
        preferred_element_type=jnp.float32)


def pallas_row_score(h0p, w2_row, *, tn=128):
    N, E = h0p.shape
    t = _pick_tile(N, tn)
    return pl.pallas_call(
        _row_score_kernel,
        out_shape=jax.ShapeDtypeStruct((1, N), jnp.float32),
        grid=(N // t,),
        in_specs=[pl.BlockSpec((1, E), lambda i: (0, 0)),
                  pl.BlockSpec((t, E), lambda i: (i, 0))],
        out_specs=pl.BlockSpec((1, t), lambda i: (0, i)),
        compiler_params=pltpu.CompilerParams(
            dimension_semantics=("parallel",)),
    )(w2_row, h0p)


# ---------------------------------------------------------------------------
# Fused per-node-type GNN attention + UQ mean/var + Gaussian loss kernel.
#   grid = (node_type, N_tile);  online softmax over the node axis.
# ---------------------------------------------------------------------------
def _inv_pow(x, rho):
    # 1 / x**rho, specialised for the common rho values (EUP rsqrt / reciprocal
    # instead of exp(rho*log(x)) followed by a VPU divide).
    if rho == 0.5:
        return jax.lax.rsqrt(x)
    if rho == 1.0:
        return 1.0 / x
    return jnp.exp(jnp.float32(-rho) * jnp.log(x))


def _fused_gnn_loss_kernel(hb_ref, st_ref, mask_ref, w1_ref, s2_ref, h0p_ref,
                           keep_ref, loss_ref, m_sc, l_sc, acc_sc,
                           *, uq_samples, keep_scale, rho, var_type):
    nt = pl.program_id(1)
    last = pl.num_programs(1) - 1

    # reset online-softmax / sample accumulators at the first N tile of a type
    @pl.when(nt == 0)
    def _():
        m_sc[...] = jnp.full(m_sc.shape, -jnp.inf, jnp.float32)
        l_sc[...] = jnp.zeros(l_sc.shape, jnp.float32)
        acc_sc[...] = jnp.zeros(acc_sc.shape, jnp.float32)

    hb = hb_ref[...]                       # (B, E)   H0_batch_p
    h0p_t = h0p_ref[...]                   # (TN, E)  current tile of H0_p

    # additive attention mask: 0 where valid, -1e30 where masked (no divide,
    # no -inf/NaN hazard)
    madd = jnp.where(mask_ref[...] > 0, jnp.float32(0.0), jnp.float32(-1e30))

    # score_1 via VPU multiply + lane reduce; score_2 precomputed once outside
    s1 = jnp.sum(hb * w1_ref[...], axis=1, keepdims=True)        # (B, 1)
    score = s1 + s2_ref[...] + madd                              # (B, TN)

    # --- online softmax over nodes ----------------------------------------
    m_prev = m_sc[...]
    m_new = jnp.maximum(m_prev, jnp.max(score, axis=1, keepdims=True))
    alpha = jnp.exp(m_prev - m_new)                              # (B, 1)
    p = jnp.exp(score - m_new)                                   # (B, TN)
    l_sc[...] = alpha * l_sc[...] + jnp.sum(p, axis=1, keepdims=True)
    m_sc[...] = m_new

    # --- UQ samples: unnormalized att @ (H0_p * keep_i), streamed over N ---
    for i in range(uq_samples):
        h0p_d = h0p_t * keep_ref[i]                              # (TN, E)
        acc_sc[i] = alpha * acc_sc[i] + jnp.dot(
            p, h0p_d, preferred_element_type=jnp.float32)

    # --- finalize on the last N tile: mean / var / Gaussian loss -----------
    @pl.when(nt == last)
    def _():
        # fold softmax normalization and 1/keep_prob rescale into one scale
        inv_l = jnp.float32(keep_scale) / l_sc[...]              # (B, 1)
        samples = [acc_sc[i] * inv_l + hb for i in range(uq_samples)]

        inv_s = jnp.float32(1.0 / uq_samples)
        mean = samples[0]
        for s in samples[1:]:
            mean = mean + s
        mean = mean * inv_s
        var = jnp.zeros_like(mean)          # two-pass: no cancellation issues
        for s in samples:
            d = s - mean
            var = var + d * d
        var = var * inv_s                                        # unbiased=False

        noise = st_ref[...] - mean
        sf = jnp.float32(0.001)
        if var_type == 'anisotropy':
            inv_nv = _inv_pow(var + sf, rho)                     # (B, E)
            per_row = 0.5 * jnp.mean(noise * noise * inv_nv,
                                     axis=1, keepdims=True)      # (B, 1)
        else:  # 'isotropy'
            inv_nv = _inv_pow(jnp.mean(var, axis=1, keepdims=True) + sf, rho)
            per_row = 0.5 * jnp.mean(noise * noise,
                                     axis=1, keepdims=True) * inv_nv
        loss_ref[...] = jnp.sum(per_row, axis=0, keepdims=True)  # (1, 1)


def fused_gnn_loss(hb_all, st_all, mask_all, w1_row, s2row, h0p, keep_all, *,
                   uq_samples, keep_scale, rho, var_type, n_tile=128):
    K, B, E = hb_all.shape
    N, _ = h0p.shape
    tn = _pick_tile(N, n_tile)
    kern = functools.partial(_fused_gnn_loss_kernel, uq_samples=uq_samples,
                             keep_scale=keep_scale, rho=rho, var_type=var_type)
    losses = pl.pallas_call(
        kern,
        out_shape=jax.ShapeDtypeStruct((K, 1, 1), jnp.float32),
        grid=(K, N // tn),                   # node types x N tiles (reduction last)
        in_specs=[
            pl.BlockSpec((None, B, E), lambda k, n: (k, 0, 0)),   # H0_batch_p
            pl.BlockSpec((None, B, E), lambda k, n: (k, 0, 0)),   # target embs
            pl.BlockSpec((None, B, tn), lambda k, n: (k, 0, n)),  # mask tile
            pl.BlockSpec((1, E), lambda k, n: (0, 0)),            # att_w1^T
            pl.BlockSpec((1, tn), lambda k, n: (0, n)),           # s2 tile
            pl.BlockSpec((tn, E), lambda k, n: (n, 0)),           # H0_p tile
            pl.BlockSpec((None, uq_samples, tn, E),
                         lambda k, n: (k, 0, n, 0)),              # keep tile
        ],
        out_specs=pl.BlockSpec((None, 1, 1), lambda k, n: (k, 0, 0)),
        scratch_shapes=[pltpu.VMEM((B, 1), jnp.float32),          # running max
                        pltpu.VMEM((B, 1), jnp.float32),          # running sum
                        pltpu.VMEM((uq_samples, B, E), jnp.float32)],
        compiler_params=pltpu.CompilerParams(
            dimension_semantics=("arbitrary", "arbitrary")),
    )(hb_all, st_all, mask_all, w1_row, s2row, h0p, keep_all)
    return losses[:, 0, 0]                                        # (K,)


# ---------------------------------------------------------------------------
# NodeEmbedding_model.forward
# ---------------------------------------------------------------------------
def node_embedding_model_forward(params, node_batchs, node_feq, var_type,
                                 mask, *, rho, uq_samples, dropout_rate,
                                 proj, dropout_key):
    # affine projection of each node type's H0 (tiled Pallas matmul), concat
    h0p_parts = []
    for n_t in params['H0']:
        if proj == 'affine':
            h0p_parts.append(pallas_matmul(params['H0'][n_t],
                                           params['proj'][n_t]))
        else:
            # TODO(synk): 'hyperplane' / 'MLP' projections not implemented.
            h0p_parts.append(params['H0'][n_t])
    h0p = jnp.concatenate(h0p_parts, axis=0)            # (N, E)
    N, E = h0p.shape

    w1_row = params['att_w1'].T                         # (1, E)
    w2_row = params['att_w2'].T                         # (1, E)
    # hoisted out of the per-node-type loop: computed once for all types
    s2row = pallas_row_score(h0p, w2_row)               # (1, N)

    types = list(node_batchs.keys())
    K = len(types)
    batch_sizes = {int(node_batchs[t].shape[0]) for t in types}
    assert len(batch_sizes) == 1, \
        "fused kernel assumes equal batch size per node type"

    # gathers / stacks (glue)
    hb_all = jnp.stack([h0p[node_batchs[t]] for t in types], 0)          # (K,B,E)
    st_all = jnp.stack([params['node_embeddings'][node_batchs[t]]
                        for t in types], 0)                              # (K,B,E)
    mask_all = jnp.stack([mask[node_batchs[t], :] for t in types], 0)    # (K,B,N)
    feq = jnp.array([node_feq[t] for t in types], jnp.float32)           # (K,)

    # dropout keep masks drawn with jax.random (pltpu.prng_* is TPU-only and
    # has no interpret/CPU lowering); binary masks, 1/keep_p rescale is folded
    # into the kernel's softmax normalization.
    if dropout_rate > 0.0:
        keep_all = jax.random.bernoulli(
            dropout_key, 1.0 - dropout_rate,
            (K, uq_samples, N, E)).astype(jnp.float32)
        keep_scale = 1.0 / (1.0 - dropout_rate)
    else:
        keep_all = jnp.ones((K, uq_samples, N, E), jnp.float32)
        keep_scale = 1.0

    per_type_loss = fused_gnn_loss(
        hb_all, st_all, mask_all, w1_row, s2row, h0p, keep_all,
        uq_samples=uq_samples, keep_scale=keep_scale, rho=rho,
        var_type=var_type)
    return jnp.sum(per_type_loss * feq)


# ---------------------------------------------------------------------------
# pure-JAX reference (dropout disabled => all UQ samples identical, var = 0)
# ---------------------------------------------------------------------------
def reference_forward_no_dropout(params, node_batchs, node_feq, var_type,
                                 mask, *, rho, proj):
    sf = 0.001
    h0p_parts = []
    for n_t in params['H0']:
        if proj == 'affine':
            h0p_parts.append(params['H0'][n_t] @ params['proj'][n_t])
        else:
            h0p_parts.append(params['H0'][n_t])
    h0p = jnp.concatenate(h0p_parts, axis=0)
    emb_loss = 0.0
    for n_t in node_batchs:
        idx = node_batchs[n_t]
        hb = h0p[idx]
        st = params['node_embeddings'][idx]
        mb = mask[idx, :]
        score = hb @ params['att_w1'] + (h0p @ params['att_w2']).T
        att = jax.nn.softmax(score + (-1.0 / mb + 1.0), axis=1)
        mean = att @ h0p + hb
        var = jnp.zeros_like(mean)
        noise = st - mean
        if var_type == 'anisotropy':
            nv = (var + sf) ** rho
            loss = 0.5 * jnp.sum(jnp.mean(noise * noise / nv, axis=1))
        else:
            nv = (jnp.mean(var, axis=1) + sf) ** rho
            loss = 0.5 * jnp.sum(jnp.mean(noise * noise, axis=1) / nv)
        emb_loss = emb_loss + loss * node_feq[n_t]
    return emb_loss


# ---------------------------------------------------------------------------
if __name__ == "__main__":
    key = jax.random.PRNGKey(0)

    E = 32                         # embedding_size
    nodes = {'a': 128, 'b': 128}   # node types -> node counts (N = 256 -> 2 tiles)
    node_num = sum(nodes.values())
    B = 16                         # batch size per node type
    UQ = 3                         # UQ_samples
    dropout = 0.1
    rho = 0.5
    proj = 'affine'
    var_type = 'anisotropy'

    keys = iter(jax.random.split(key, 16))
    params = {'H0': {}, 'proj': {}}
    for n_t, n in nodes.items():
        params['H0'][n_t] = 0.01 * jax.random.normal(next(keys), (n, E), jnp.float32)
        params['proj'][n_t] = 0.01 * jax.random.normal(next(keys), (E, E), jnp.float32)
    params['att_w1'] = 0.01 * jax.random.normal(next(keys), (E, 1), jnp.float32)
    params['att_w2'] = 0.01 * jax.random.normal(next(keys), (E, 1), jnp.float32)
    params['node_embeddings'] = 0.01 * jax.random.normal(
        next(keys), (node_num, E), jnp.float32)

    # binary attention mask, at least one valid node per row
    mask = (jax.random.uniform(next(keys), (node_num, node_num)) > 0.5
            ).astype(jnp.float32)
    mask = mask.at[jnp.arange(node_num), jnp.arange(node_num)].set(1.0)

    node_batchs = {
        'a': jax.random.randint(next(keys), (B,), 0, nodes['a']),
        'b': jax.random.randint(next(keys), (B,), nodes['a'], node_num),
    }
    node_feq = {'a': 1.0, 'b': 0.5}
    drop_key = next(keys)

    # full forward (dropout active -> nonzero UQ variance)
    emb_loss = node_embedding_model_forward(
        params, node_batchs, node_feq, var_type, mask,
        rho=rho, uq_samples=UQ, dropout_rate=dropout, proj=proj,
        dropout_key=drop_key)
    emb_loss = jax.block_until_ready(emb_loss)
    assert bool(jnp.isfinite(emb_loss)), emb_loss

    # correctness check against pure-JAX reference with dropout disabled
    # (the kernel is then fully deterministic)
    emb_loss_nd = node_embedding_model_forward(
        params, node_batchs, node_feq, var_type, mask,
        rho=rho, uq_samples=UQ, dropout_rate=0.0, proj=proj,
        dropout_key=drop_key)
    ref_nd = reference_forward_no_dropout(
        params, node_batchs, node_feq, var_type, mask, rho=rho, proj=proj)
    jax.block_until_ready(emb_loss_nd)
    assert jnp.allclose(emb_loss_nd, ref_nd, rtol=1e-3, atol=1e-5), (emb_loss_nd, ref_nd)

    print("KERNEL_OK")
</pallas_src>

<mosaic_0001>
module attributes {stable_mosaic.version = 11 : i64} {
  func.func @_matmul_kernel(%arg0: i32, %arg1: i32, %arg2: i32, %arg3: memref<128x32xf32, #tpu.memory_space<vmem>>, %arg4: memref<32x32xf32, #tpu.memory_space<vmem>>, %arg5: memref<128x32xf32, #tpu.memory_space<vmem>>, %arg6: memref<128x32xf32, #tpu.memory_space<vmem>>) attributes {dimension_semantics = [#tpu.dimension_semantics<parallel>, #tpu.dimension_semantics<parallel>, #tpu.dimension_semantics<arbitrary>], iteration_bounds = array<i64: 1, 1, 1>, scalar_prefetch = 0 : i64, scratch_operands = 1 : i64, tpu.core_type = #tpu.core_type<tc>, window_params = [{transform_indices = @transform_0, window_bounds = array<i64: 128, 32>}, {transform_indices = @transform_1, window_bounds = array<i64: 32, 32>}, {transform_indices = @transform_2, window_bounds = array<i64: 128, 32>}]} {
    %c0_i32 = arith.constant 0 : i32
    %0 = arith.cmpi eq, %arg2, %c0_i32 : i32
    %1 = arith.extui %0 : i1 to i32
    %c0_i32_0 = arith.constant 0 : i32
    %2 = arith.cmpi ne, %1, %c0_i32_0 : i32
    scf.if %2 {
      %cst_10 = arith.constant 0.000000e+00 : f32
      %12 = vector.broadcast %cst_10 : f32 to vector<128x32xf32>
      %c0_11 = arith.constant 0 : index
      %c0_12 = arith.constant 0 : index
      %13 = vector.load %arg6[%c0_11, %c0_12] : memref<128x32xf32, #tpu.memory_space<vmem>>, vector<128x32xf32>
      tpu.vector_store %arg6[%c0_11, %c0_12], %12 {strides = array<i32>} : memref<128x32xf32, #tpu.memory_space<vmem>>, vector<128x32xf32>,
    } else {
    }
    %c0 = arith.constant 0 : index
    %c0_1 = arith.constant 0 : index
    %3 = vector.load %arg6[%c0, %c0_1] : memref<128x32xf32, #tpu.memory_space<vmem>>, vector<128x32xf32>
    %c0_2 = arith.constant 0 : index
    %c0_3 = arith.constant 0 : index
    %4 = vector.load %arg3[%c0_2, %c0_3] : memref<128x32xf32, #tpu.memory_space<vmem>>, vector<128x32xf32>
    %c0_4 = arith.constant 0 : index
    %c0_5 = arith.constant 0 : index
    %5 = vector.load %arg4[%c0_4, %c0_5] : memref<32x32xf32, #tpu.memory_space<vmem>>, vector<32x32xf32>
    %cst = arith.constant dense<0.000000e+00> : vector<128x32xf32>
    %6 = tpu.matmul %4, %5, %cst {dimension_numbers = #tpu.dot_dimension_numbers<[1], [0], [0], [1], [0, 0, 1, 1], [], []>} : vector<128x32xf32>, vector<32x32xf32>, vector<128x32xf32> -> vector<128x32xf32>
    %7 = arith.addf %3, %6 : vector<128x32xf32>
    %c0_6 = arith.constant 0 : index
    %c0_7 = arith.constant 0 : index
    %8 = vector.load %arg6[%c0_6, %c0_7] : memref<128x32xf32, #tpu.memory_space<vmem>>, vector<128x32xf32>
    tpu.vector_store %arg6[%c0_6, %c0_7], %7 {strides = array<i32>} : memref<128x32xf32, #tpu.memory_space<vmem>>, vector<128x32xf32>,
    %c0_i32_8 = arith.constant 0 : i32
    %9 = arith.cmpi eq, %arg2, %c0_i32_8 : i32
    %10 = arith.extui %9 : i1 to i32
    %c0_i32_9 = arith.constant 0 : i32
    %11 = arith.cmpi ne, %10, %c0_i32_9 : i32
    scf.if %11 {
      %c0_10 = arith.constant 0 : index
      %c0_11 = arith.constant 0 : index
      %12 = vector.load %arg6[%c0_10, %c0_11] : memref<128x32xf32, #tpu.memory_space<vmem>>, vector<128x32xf32>
      %c0_12 = arith.constant 0 : index
      %c0_13 = arith.constant 0 : index
      %13 = vector.load %arg5[%c0_12, %c0_13] : memref<128x32xf32, #tpu.memory_space<vmem>>, vector<128x32xf32>
      tpu.vector_store %arg5[%c0_12, %c0_13], %12 {strides = array<i32>} : memref<128x32xf32, #tpu.memory_space<vmem>>, vector<128x32xf32>,
    } else {
    }
    return
  }
  func.func @transform_0(%arg0: i32, %arg1: i32, %arg2: i32) -> (i32, i32) {
    %c0_i32 = arith.constant 0 : i32
    return %arg0, %arg2 : i32, i32
  }
  func.func @transform_1(%arg0: i32, %arg1: i32, %arg2: i32) -> (i32, i32) {
    %c0_i32 = arith.constant 0 : i32
    return %arg2, %arg1 : i32, i32
  }
  func.func @transform_2(%arg0: i32, %arg1: i32, %arg2: i32) -> (i32, i32) {
    %c0_i32 = arith.constant 0 : i32
    return %arg0, %arg1 : i32, i32
  }
}

</mosaic_0001>

<llo_original>
// kernel: tpu_custom_call.1
$region0: #{tpu_custom_call.1}
  #allocation0 [shape = 'u32[]', space=smem, size = 0x4, offset = 0x4, fixed_abs, tag = 'smem constant byte address 0x4 - core index']
  #allocation1 [shape = 'u32[144,128]{1,0:T(1,128)}', space=vmem, size = 0x12000, scoped, tag = 'internal scratch']
  #allocation2 [shape = 'f32[128,32]{1,0:T(8,128)}', space=vmem, size = 0x10000, scoped, tag = 'scratch operand']
  %s0 = inlined_call_operand.vmem [shape: f32[128,32], index: 0, kind: input, shape index: {}]
  %s1 = inlined_call_operand.vmem [shape: f32[32,32], index: 1, kind: input, shape index: {}]
  %s2 = inlined_call_operand.vmem [shape: f32[128,32], index: 2, kind: output, shape index: {}]
  %s3 = sld [smem:[#allocation0]]
  $region26: #{tpu_custom_call.1} parent=0
    _
  %s5 = ssub.s32 1, %s3
  %s6 = scalar_select 0, %s5, %s3
  // Predicated region
  $region2: #{tpu_custom_call.1} parent=0 // pred_check
    _
  $region3: #{tpu_custom_call.1} parent=0 // pred_check_branch
    %8 = sbr.rel (0) target = $region5
  $region4: #{tpu_custom_call.1} parent=0 // pred_region
    _
  $region5: #{tpu_custom_call.1} parent=0 // pred_fallthru
    _
  // Predicated region
  $region6: #{tpu_custom_call.1} parent=0 // pred_check
    _
  $region7: #{tpu_custom_call.1} parent=0 // pred_check_branch
    %10 = sbr.rel (0) target = $region9
  $region8: #{tpu_custom_call.1} parent=0 // pred_region
    _
  $region9: #{tpu_custom_call.1} parent=0 // pred_fallthru
    _
  %p11 = scmp.eq.s32.totalorder 0, 0
  // Predicated region
  $region10: #{tpu_custom_call.1} parent=0 // pred_check
    %p12 = pneg %p11
  $region11: #{tpu_custom_call.1} parent=0 // pred_check_branch
    %14 = sbr.rel (%p12) target = $region13
  $region12: #{tpu_custom_call.1} parent=0 // pred_region
    %vm15 = vcmask 261120
    %16 = vst.msk [vmem:[#allocation2] sm:$0xff] %vm15, 0.0
    %17 = vst.msk [vmem:[#allocation2 + $0x8] sm:$0xff] %vm15, 0.0
    %18 = vst.msk [vmem:[#allocation2 + $0x10] sm:$0xff] %vm15, 0.0
    %19 = vst.msk [vmem:[#allocation2 + $0x18] sm:$0xff] %vm15, 0.0
    %20 = vst.msk [vmem:[#allocation2 + $0x20] sm:$0xff] %vm15, 0.0
    %21 = vst.msk [vmem:[#allocation2 + $0x28] sm:$0xff] %vm15, 0.0
    %22 = vst.msk [vmem:[#allocation2 + $0x30] sm:$0xff] %vm15, 0.0
    %23 = vst.msk [vmem:[#allocation2 + $0x38] sm:$0xff] %vm15, 0.0
    %24 = vst.msk [vmem:[#allocation2 + $0x40] sm:$0xff] %vm15, 0.0
    %25 = vst.msk [vmem:[#allocation2 + $0x48] sm:$0xff] %vm15, 0.0
    %26 = vst.msk [vmem:[#allocation2 + $0x50] sm:$0xff] %vm15, 0.0
    %27 = vst.msk [vmem:[#allocation2 + $0x58] sm:$0xff] %vm15, 0.0
    %28 = vst.msk [vmem:[#allocation2 + $0x60] sm:$0xff] %vm15, 0.0
    %29 = vst.msk [vmem:[#allocation2 + $0x68] sm:$0xff] %vm15, 0.0
    %30 = vst.msk [vmem:[#allocation2 + $0x70] sm:$0xff] %vm15, 0.0
    %31 = vst.msk [vmem:[#allocation2 + $0x78] sm:$0xff] %vm15, 0.0
  $region13: #{tpu_custom_call.1} parent=0 // pred_fallthru
    _
  %v32 = vld [vmem:[#allocation2] sm:$0xff]
  %v33 = vld [vmem:[#allocation2 + $0x8] sm:$0xff]
  %v34 = vld [vmem:[#allocation2 + $0x10] sm:$0xff]
  %v35 = vld [vmem:[#allocation2 + $0x18] sm:$0xff]
  %v36 = vld [vmem:[#allocation2 + $0x20] sm:$0xff]
  %v37 = vld [vmem:[#allocation2 + $0x28] sm:$0xff]
  %v38 = vld [vmem:[#allocation2 + $0x30] sm:$0xff]
  %v39 = vld [vmem:[#allocation2 + $0x38] sm:$0xff]
  %v40 = vld [vmem:[#allocation2 + $0x40] sm:$0xff]
  %v41 = vld [vmem:[#allocation2 + $0x48] sm:$0xff]
  %v42 = vld [vmem:[#allocation2 + $0x50] sm:$0xff]
  %v43 = vld [vmem:[#allocation2 + $0x58] sm:$0xff]
  %v44 = vld [vmem:[#allocation2 + $0x60] sm:$0xff]
  %v45 = vld [vmem:[#allocation2 + $0x68] sm:$0xff]
  %v46 = vld [vmem:[#allocation2 + $0x70] sm:$0xff]
  %v47 = vld [vmem:[#allocation2 + $0x78] sm:$0xff]
  %v48 = vld [vmem:[%s0] sm:$0xff]
  %v49 = vld [vmem:[%s0 + $0x8] sm:$0xff]
  %v50 = vld [vmem:[%s0 + $0x10] sm:$0xff]
  %v51 = vld [vmem:[%s0 + $0x18] sm:$0xff]
  %v52 = vld [vmem:[%s0 + $0x20] sm:$0xff]
  %v53 = vld [vmem:[%s0 + $0x28] sm:$0xff]
  %v54 = vld [vmem:[%s0 + $0x30] sm:$0xff]
  %v55 = vld [vmem:[%s0 + $0x38] sm:$0xff]
  %v56 = vld [vmem:[%s0 + $0x40] sm:$0xff]
  %v57 = vld [vmem:[%s0 + $0x48] sm:$0xff]
  %v58 = vld [vmem:[%s0 + $0x50] sm:$0xff]
  %v59 = vld [vmem:[%s0 + $0x58] sm:$0xff]
  %v60 = vld [vmem:[%s0 + $0x60] sm:$0xff]
  %v61 = vld [vmem:[%s0 + $0x68] sm:$0xff]
  %v62 = vld [vmem:[%s0 + $0x70] sm:$0xff]
  %v63 = vld [vmem:[%s0 + $0x78] sm:$0xff]
  %v64 = vld [vmem:[%s1] sm:$0xff]
  %v65 = vld [vmem:[%s1 + $0x8] sm:$0xff]
  %v66 = vld [vmem:[%s1 + $0x10] sm:$0xff]
  %v67 = vld [vmem:[%s1 + $0x18] sm:$0xff]
  %vm68 = vcmask 261120
  %v70 = vsel %vm68, %v48, 0
  %v73 = vsel %vm68, %v49, 0
  %v76 = vsel %vm68, %v50, 0
  %v79 = vsel %vm68, %v51, 0
  %v82 = vsel %vm68, %v52, 0
  %v85 = vsel %vm68, %v53, 0
  %v88 = vsel %vm68, %v54, 0
  %v91 = vsel %vm68, %v55, 0
  %v94 = vsel %vm68, %v56, 0
  %v97 = vsel %vm68, %v57, 0
  %v100 = vsel %vm68, %v58, 0
  %v103 = vsel %vm68, %v59, 0
  %v106 = vsel %vm68, %v60, 0
  %v109 = vsel %vm68, %v61, 0
  %v112 = vsel %vm68, %v62, 0
  %v115 = vsel %vm68, %v63, 0
  %117 = vmatprep.subr.mxu0 0.0
  %118 = vmatpush1.msra.mxu0 %v64
  %119 = vmatprep.subr.mxu0 0.0
  %120 = vmatpush1.msra.mxu0 %v65
  %121 = vmatprep.subr.mxu0 0.0
  %122 = vmatpush1.msra.mxu0 %v66
  %123 = vmatprep.subr.mxu0 0.0
  %124 = vmatpush1.msra.mxu0 %v67
  %125 = vmatprep.subr.mxu0 0.0
  %126 = vmatpush1.msra.mxu0 0.0
  %127 = vmatprep.subr.mxu0 0.0
  %128 = vmatpush1.msra.mxu0 0.0
  %129 = vmatprep.subr.mxu0 0.0
  %130 = vmatpush1.msra.mxu0 0.0
  %131 = vmatprep.subr.mxu0 0.0
  %132 = vmatpush1.msra.mxu0 0.0
  %133 = vmatprep.subr.mxu0 0.0
  %134 = vmatpush1.msra.mxu0 0.0
  %135 = vmatprep.subr.mxu0 0.0
  %136 = vmatpush1.msra.mxu0 0.0
  %137 = vmatprep.subr.mxu0 0.0
  %138 = vmatpush1.msra.mxu0 0.0
  %139 = vmatprep.subr.mxu0 0.0
  %140 = vmatpush1.msra.mxu0 0.0
  %141 = vmatprep.subr.mxu0 0.0
  %142 = vmatpush1.msra.mxu0 0.0
  %143 = vmatprep.subr.mxu0 0.0
  %144 = vmatpush1.msra.mxu0 0.0
  %145 = vmatprep.subr.mxu0 0.0
  %146 = vmatpush1.msra.mxu0 0.0
  %147 = vmatprep.subr.mxu0 0.0
  %148 = vmatpush1.msra.mxu0 0.0
  %149 = vmatprep.subr.mxu0 0.0
  %150 = vmatpush1.msra.mxu0 0.0
  %151 = vmatprep.subr.mxu0 0.0
  %152 = vmatpush1.msra.mxu0 0.0
  %153 = vmatprep.subr.mxu0 0.0
  %154 = vmatpush1.msra.mxu0 0.0
  %155 = vmatprep.subr.mxu0 0.0
  %156 = vmatpush1.msra.mxu0 0.0
  %157 = vmatprep.subr.mxu0 0.0
  %158 = vmatpush1.msra.mxu0 0.0
  %159 = vmatprep.subr.mxu0 0.0
  %160 = vmatpush1.msra.mxu0 0.0
  %161 = vmatprep.subr.mxu0 0.0
  %162 = vmatpush1.msra.mxu0 0.0
  %163 = vmatprep.subr.mxu0 0.0
  %164 = vmatpush1.msra.mxu0 0.0
  %165 = vmatprep.subr.mxu0 0.0
  %166 = vmatpush1.msra.mxu0 0.0
  %167 = vmatprep.subr.mxu0 0.0
  %168 = vmatpush1.msra.mxu0 0.0
  %169 = vmatprep.subr.mxu0 0.0
  %170 = vmatpush1.msra.mxu0 0.0
  %171 = vmatprep.subr.mxu0 0.0
  %172 = vmatpush1.msra.mxu0 0.0
  %173 = vmatprep.subr.mxu0 0.0
  %174 = vmatpush1.msra.mxu0 0.0
  %175 = vmatprep.subr.mxu0 0.0
  %176 = vmatpush1.msra.mxu0 0.0
  %177 = vmatprep.subr.mxu0 0.0
  %178 = vmatpush1.msra.mxu0 0.0
  %179 = vmatprep.subr.mxu0 0.0
  %180 = vmatpush1.msra.mxu0 0.0
  %181 = vmatprep.mubr.f32.mxu0 0.0
  %182 = vmatmul.mubr.f32.gmra.mrb[0].mxu0 %v70
  %v183 = vpop.f32.mrb[0].mxu0
  %v184 = vadd.f32 0.0, %v183
  %v185 = vpop.f32.mrb[0].mxu0
  %186 = vmatprep.mubr.f32.mxu0 0.0
  %187 = vmatmul.mubr.f32.gmra.mrb[0].mxu0 %v73
  %v188 = vpop.f32.mrb[0].mxu0
  %v189 = vadd.f32 0.0, %v188
  %v190 = vpop.f32.mrb[0].mxu0
  %191 = vmatprep.mubr.f32.mxu0 0.0
  %192 = vmatmul.mubr.f32.gmra.mrb[0].mxu0 %v76
  %v193 = vpop.f32.mrb[0].mxu0
  %v194 = vadd.f32 0.0, %v193
  %v195 = vpop.f32.mrb[0].mxu0
  %196 = vmatprep.mubr.f32.mxu0 0.0
  %197 = vmatmul.mubr.f32.gmra.mrb[0].mxu0 %v79
  %v198 = vpop.f32.mrb[0].mxu0
  %v199 = vadd.f32 0.0, %v198
  %v200 = vpop.f32.mrb[0].mxu0
  %201 = vmatprep.mubr.f32.mxu0 0.0
  %202 = vmatmul.mubr.f32.gmra.mrb[0].mxu0 %v82
  %v203 = vpop.f32.mrb[0].mxu0
  %v204 = vadd.f32 0.0, %v203
  %v205 = vpop.f32.mrb[0].mxu0
  %206 = vmatprep.mubr.f32.mxu0 0.0
  %207 = vmatmul.mubr.f32.gmra.mrb[0].mxu0 %v85
  %v208 = vpop.f32.mrb[0].mxu0
  %v209 = vadd.f32 0.0, %v208
  %v210 = vpop.f32.mrb[0].mxu0
  %211 = vmatprep.mubr.f32.mxu0 0.0
  %212 = vmatmul.mubr.f32.gmra.mrb[0].mxu0 %v88
  %v213 = vpop.f32.mrb[0].mxu0
  %v214 = vadd.f32 0.0, %v213
  %v215 = vpop.f32.mrb[0].mxu0
  %216 = vmatprep.mubr.f32.mxu0 0.0
  %217 = vmatmul.mubr.f32.gmra.mrb[0].mxu0 %v91
  %v218 = vpop.f32.mrb[0].mxu0
  %v219 = vadd.f32 0.0, %v218
  %v220 = vpop.f32.mrb[0].mxu0
  %221 = vmatprep.mubr.f32.mxu0 0.0
  %222 = vmatmul.mubr.f32.gmra.mrb[0].mxu0 %v94
  %v223 = vpop.f32.mrb[0].mxu0
  %v224 = vadd.f32 0.0, %v223
  %v225 = vpop.f32.mrb[0].mxu0
  %226 = vmatprep.mubr.f32.mxu0 0.0
  %227 = vmatmul.mubr.f32.gmra.mrb[0].mxu0 %v97
  %v228 = vpop.f32.mrb[0].mxu0
  %v229 = vadd.f32 0.0, %v228
  %v230 = vpop.f32.mrb[0].mxu0
  %231 = vmatprep.mubr.f32.mxu0 0.0
  %232 = vmatmul.mubr.f32.gmra.mrb[0].mxu0 %v100
  %v233 = vpop.f32.mrb[0].mxu0
  %v234 = vadd.f32 0.0, %v233
  %v235 = vpop.f32.mrb[0].mxu0
  %236 = vmatprep.mubr.f32.mxu0 0.0
  %237 = vmatmul.mubr.f32.gmra.mrb[0].mxu0 %v103
  %v238 = vpop.f32.mrb[0].mxu0
  %v239 = vadd.f32 0.0, %v238
  %v240 = vpop.f32.mrb[0].mxu0
  %241 = vmatprep.mubr.f32.mxu0 0.0
  %242 = vmatmul.mubr.f32.gmra.mrb[0].mxu0 %v106
  %v243 = vpop.f32.mrb[0].mxu0
  %v244 = vadd.f32 0.0, %v243
  %v245 = vpop.f32.mrb[0].mxu0
  %246 = vmatprep.mubr.f32.mxu0 0.0
  %247 = vmatmul.mubr.f32.gmra.mrb[0].mxu0 %v109
  %v248 = vpop.f32.mrb[0].mxu0
  %v249 = vadd.f32 0.0, %v248
  %v250 = vpop.f32.mrb[0].mxu0
  %251 = vmatprep.mubr.f32.mxu0 0.0
  %252 = vmatmul.mubr.f32.gmra.mrb[0].mxu0 %v112
  %v253 = vpop.f32.mrb[0].mxu0
  %v254 = vadd.f32 0.0, %v253
  %v255 = vpop.f32.mrb[0].mxu0
  %256 = vmatprep.mubr.f32.mxu0 0.0
  %257 = vmatmul.mubr.f32.gmra.mrb[0].mxu0 %v115
  %v258 = vpop.f32.mrb[0].mxu0
  %v259 = vadd.f32 0.0, %v258
  %v260 = vpop.f32.mrb[0].mxu0
  %261 = vdwg.mxu0
  %v262 = vadd.f32 %v32, %v184
  %v263 = vadd.f32 %v33, %v189
  %v264 = vadd.f32 %v34, %v194
  %v265 = vadd.f32 %v35, %v199
  %v266 = vadd.f32 %v36, %v204
  %v267 = vadd.f32 %v37, %v209
  %v268 = vadd.f32 %v38, %v214
  %v269 = vadd.f32 %v39, %v219
  %v270 = vadd.f32 %v40, %v224
  %v271 = vadd.f32 %v41, %v229
  %v272 = vadd.f32 %v42, %v234
  %v273 = vadd.f32 %v43, %v239
  %v274 = vadd.f32 %v44, %v244
  %v275 = vadd.f32 %v45, %v249
  %v276 = vadd.f32 %v46, %v254
  %v277 = vadd.f32 %v47, %v259
  %278 = vst.msk [vmem:[#allocation2] sm:$0xff] %vm68, %v262
  %279 = vst.msk [vmem:[#allocation2 + $0x8] sm:$0xff] %vm68, %v263
  %280 = vst.msk [vmem:[#allocation2 + $0x10] sm:$0xff] %vm68, %v264
  %281 = vst.msk [vmem:[#allocation2 + $0x18] sm:$0xff] %vm68, %v265
  %282 = vst.msk [vmem:[#allocation2 + $0x20] sm:$0xff] %vm68, %v266
  %283 = vst.msk [vmem:[#allocation2 + $0x28] sm:$0xff] %vm68, %v267
  %284 = vst.msk [vmem:[#allocation2 + $0x30] sm:$0xff] %vm68, %v268
  %285 = vst.msk [vmem:[#allocation2 + $0x38] sm:$0xff] %vm68, %v269
  %286 = vst.msk [vmem:[#allocation2 + $0x40] sm:$0xff] %vm68, %v270
  %287 = vst.msk [vmem:[#allocation2 + $0x48] sm:$0xff] %vm68, %v271
  %288 = vst.msk [vmem:[#allocation2 + $0x50] sm:$0xff] %vm68, %v272
  %289 = vst.msk [vmem:[#allocation2 + $0x58] sm:$0xff] %vm68, %v273
  %290 = vst.msk [vmem:[#allocation2 + $0x60] sm:$0xff] %vm68, %v274
  %291 = vst.msk [vmem:[#allocation2 + $0x68] sm:$0xff] %vm68, %v275
  %292 = vst.msk [vmem:[#allocation2 + $0x70] sm:$0xff] %vm68, %v276
  %293 = vst.msk [vmem:[#allocation2 + $0x78] sm:$0xff] %vm68, %v277
  // Predicated region
  $region14: #{tpu_custom_call.1} parent=0 // pred_check
    %p294 = pneg %p11
  $region15: #{tpu_custom_call.1} parent=0 // pred_check_branch
    %296 = sbr.rel (%p294) target = $region17
  $region16: #{tpu_custom_call.1} parent=0 // pred_region
    %v297 = vld [vmem:[#allocation2] sm:$0xff]
    %v298 = vld [vmem:[#allocation2 + $0x8] sm:$0xff]
    %v299 = vld [vmem:[#allocation2 + $0x10] sm:$0xff]
    %v300 = vld [vmem:[#allocation2 + $0x18] sm:$0xff]
    %v301 = vld [vmem:[#allocation2 + $0x20] sm:$0xff]
    %v302 = vld [vmem:[#allocation2 + $0x28] sm:$0xff]
    %v303 = vld [vmem:[#allocation2 + $0x30] sm:$0xff]
    %v304 = vld [vmem:[#allocation2 + $0x38] sm:$0xff]
    %v305 = vld [vmem:[#allocation2 + $0x40] sm:$0xff]
    %v306 = vld [vmem:[#allocation2 + $0x48] sm:$0xff]
    %v307 = vld [vmem:[#allocation2 + $0x50] sm:$0xff]
    %v308 = vld [vmem:[#allocation2 + $0x58] sm:$0xff]
    %v309 = vld [vmem:[#allocation2 + $0x60] sm:$0xff]
    %v310 = vld [vmem:[#allocation2 + $0x68] sm:$0xff]
    %v311 = vld [vmem:[#allocation2 + $0x70] sm:$0xff]
    %v312 = vld [vmem:[#allocation2 + $0x78] sm:$0xff]
    %313 = vst.msk [vmem:[%s2] sm:$0xff] %vm68, %v297
    %314 = vst.msk [vmem:[%s2 + $0x8] sm:$0xff] %vm68, %v298
    %315 = vst.msk [vmem:[%s2 + $0x10] sm:$0xff] %vm68, %v299
    %316 = vst.msk [vmem:[%s2 + $0x18] sm:$0xff] %vm68, %v300
    %317 = vst.msk [vmem:[%s2 + $0x20] sm:$0xff] %vm68, %v301
    %318 = vst.msk [vmem:[%s2 + $0x28] sm:$0xff] %vm68, %v302
    %319 = vst.msk [vmem:[%s2 + $0x30] sm:$0xff] %vm68, %v303
    %320 = vst.msk [vmem:[%s2 + $0x38] sm:$0xff] %vm68, %v304
    %321 = vst.msk [vmem:[%s2 + $0x40] sm:$0xff] %vm68, %v305
    %322 = vst.msk [vmem:[%s2 + $0x48] sm:$0xff] %vm68, %v306
    %323 = vst.msk [vmem:[%s2 + $0x50] sm:$0xff] %vm68, %v307
    %324 = vst.msk [vmem:[%s2 + $0x58] sm:$0xff] %vm68, %v308
    %325 = vst.msk [vmem:[%s2 + $0x60] sm:$0xff] %vm68, %v309
    %326 = vst.msk [vmem:[%s2 + $0x68] sm:$0xff] %vm68, %v310
    %327 = vst.msk [vmem:[%s2 + $0x70] sm:$0xff] %vm68, %v311
    %328 = vst.msk [vmem:[%s2 + $0x78] sm:$0xff] %vm68, %v312
  $region17: #{tpu_custom_call.1} parent=0 // pred_fallthru
    _
  // Predicated region
  $region18: #{tpu_custom_call.1} parent=0 // pred_check
    _
  $region19: #{tpu_custom_call.1} parent=0 // pred_check_branch
    %330 = sbr.rel (0) target = $region21
  $region20: #{tpu_custom_call.1} parent=0 // pred_region
    _
  $region21: #{tpu_custom_call.1} parent=0 // pred_fallthru
    _
  // Predicated region
  $region22: #{tpu_custom_call.1} parent=0 // pred_check
    _
  $region23: #{tpu_custom_call.1} parent=0 // pred_check_branch
    %332 = sbr.rel (0) target = $region25
  $region24: #{tpu_custom_call.1} parent=0 // pred_region
    _
  $region25: #{tpu_custom_call.1} parent=0 // pred_fallthru
    _

</llo_original>
